<compile_context>
chip_gen: v7x
topology: tpu7x:2x2x1
jax: 0.10.0
libtpu: 0.0.40
codegen_flags: <defaults>
</compile_context>

<pallas_src>
import warnings

import jax
import jax.numpy as jnp
from jax.experimental import pallas as pl
from jax.experimental.pallas import tpu as pltpu


def _identity_kernel(x_ref, o_ref):
    # One vld / one vst per vreg: copy the VMEM tile straight through.
    o_ref[...] = x_ref[...]


# dtype-aware sublane packing minimums (itemsize -> rows per packed vreg)
_SUBLANE_MULT = {1: 32, 2: 16, 4: 8, 8: 8}

# ~4 MiB per block: the tiled-copy roofline saturates (~86% of HBM BW) well
# below this, and (in + out) x 2 pipeline buffers x 4 MiB = 16 MiB fits under
# the default scoped-VMEM limit on v5e/v6e (32 MiB) and v7x (32 MiB scoped /
# 64 MiB physical).
_TARGET_BLOCK_BYTES = 4 * 1024 * 1024


def _pallas_identity_copy(x: jax.Array) -> jax.Array:
    """Materializing identity copy via a lane-dense tiled Pallas kernel.

    The tensor is flattened (contiguous -> free reshape) and presented as a 2D
    slab whose last dim is a large multiple of 128 lanes, so every store is an
    unmasked full-width `vst` and no jnp.pad / edge-mask passes are needed.
    """
    if x.ndim == 0 or x.size == 0:
        return x

    total = int(x.size)
    if total % 128 != 0:
        # TODO(synk): non-lane-aligned element count; a masked edge copy is not
        # worth an extra HBM pass for an identity — pass through unchanged.
        return x

    # Lane-dense last dim: largest of these multiples of 128 dividing `total`.
    tn = 128
    for cand in (4096, 2048, 1024, 512, 256, 128):
        if total % cand == 0:
            tn = cand
            break
    rows = total // tn
    x2d = x.reshape(rows, tn)

    itemsize = jnp.dtype(x.dtype).itemsize
    sub = _SUBLANE_MULT.get(itemsize, 8)

    target_rows = max(sub, _TARGET_BLOCK_BYTES // (tn * itemsize))
    if rows <= target_rows:
        # Block covers the full row extent; block dim == array dim is always
        # legal even when it is not a multiple of the sublane packing.
        tm = rows
    else:
        tm = max(sub, (target_rows // sub) * sub)  # dtype-aware sublane rounding

    grid = (pl.cdiv(rows, tm),)

    y2d = pl.pallas_call(
        _identity_kernel,
        out_shape=jax.ShapeDtypeStruct((rows, tn), x.dtype),
        grid_spec=pltpu.PrefetchScalarGridSpec(
            num_scalar_prefetch=0,
            grid=grid,
            in_specs=[pl.BlockSpec((tm, tn), lambda i: (i, 0))],
            out_specs=pl.BlockSpec((tm, tn), lambda i: (i, 0)),
        ),
        compiler_params=pltpu.CompilerParams(
            dimension_semantics=("parallel",),
        ),
    )(x2d)
    return y2d.reshape(x.shape)


class Hook:
    """JAX/Pallas analogue of sainomore.hooks.Hook (identity forward)."""

    def __init__(self, forward: bool = True, backward: bool = False,
                 hidden: bool = False, materialize: bool = False) -> None:
        self._forward = forward
        self._backward = backward
        self._hidden = hidden
        # When False (default), __call__ returns x itself — identical object
        # semantics to PyTorch's identity forward and zero HBM traffic.  When
        # True, the Pallas identity-copy kernel materializes a fresh buffer.
        self.materialize = materialize
        self._cache_fwd = None
        self._cache_bwd = None

    @property
    def hidden(self) -> bool:
        return self._hidden

    def reset(self, forward=None, backward=None) -> None:
        if forward is not None:
            self._forward = forward
        if backward is not None:
            self._backward = backward
        self._cache_fwd = None
        self._cache_bwd = None

    @property
    def fwd(self):
        if self._cache_fwd is None:
            raise ValueError("Did not save forward pass of Hook")
        return self._cache_fwd

    @property
    def bwd(self):
        if self._cache_bwd is None:
            raise ValueError("Did not save backward pass of Hook")
        return self._cache_bwd

    def __call__(self, x: jax.Array) -> jax.Array:
        # Hook semantics: cache the input (what register_forward_hook would do),
        # then return it unchanged.
        if self._forward:
            self._cache_fwd = x
        if not self.materialize:
            # Fast path: no copy, no kernel launch — exact PyTorch behavior.
            return x
        return _pallas_identity_copy(x)

    # TODO(synk): attach/release wrap PyTorch autograd hook registration (no
    # runtime compute); there is no Pallas-side equivalent to register.
    def attach(self) -> None:
        pass

    def release(self) -> None:
        pass


class HookCollection:
    """JAX/Pallas analogue of sainomore.hooks.HookCollection."""

    def __init__(self, *names: str) -> None:
        self._hooks: dict[str, Hook] = {}
        self.add_hooks(*names)

    @property
    def names(self) -> tuple[str, ...]:
        return tuple(self._hooks.keys())

    def add_hooks(self, *names: str, hidden: bool = False) -> None:
        for name in names:
            if name in self._hooks:
                warnings.warn(f"Already hooked {name!r}", RuntimeWarning)
            self._hooks[name] = Hook(hidden=hidden)

    def get(self, name: str) -> Hook:
        if name not in self._hooks:
            raise KeyError(f"No hook named {name!r} found")
        return self._hooks[name]

    def forward(self, name: str, x: jax.Array) -> jax.Array:
        return self.get(name)(x)

    __call__ = forward

    def attach_all(self, *, forward=None, backward=None) -> None:
        for name in self._hooks:
            if not self._hooks[name].hidden:
                self._hooks[name].reset(forward=forward, backward=backward)
                self._hooks[name].attach()

    def release_all(self) -> None:
        for name in self._hooks:
            if not self._hooks[name].hidden:
                self._hooks[name].release()


if __name__ == "__main__":
    key = jax.random.PRNGKey(0)
    # NCHW input, small shapes: batch=2, channels=4, spatial=16x16
    x = jax.random.normal(key, (2, 4, 16, 16), dtype=jnp.float32)

    hooks = HookCollection("pre_attn", "post_attn")

    # Default path: identity pass-through, returns x itself (PyTorch semantics).
    y = hooks("pre_attn", x)
    assert y is x
    assert hooks.get("pre_attn").fwd is x

    # Materializing path: exercise the Pallas identity-copy kernel once on TPU.
    hooks.get("post_attn").materialize = True
    y2 = hooks("post_attn", x)
    y2 = jax.block_until_ready(y2)

    assert y2.shape == x.shape and y2.dtype == x.dtype
    assert bool(jnp.all(y2 == x))
    assert hooks.get("post_attn").fwd is x

    print("KERNEL_OK")
</pallas_src>

<mosaic_0001>
module attributes {stable_mosaic.version = 11 : i64} {
  func.func @_identity_kernel(%arg0: i32, %arg1: memref<1x2048xf32, #tpu.memory_space<vmem>>, %arg2: memref<1x2048xf32, #tpu.memory_space<vmem>>) attributes {dimension_semantics = [#tpu.dimension_semantics<parallel>], iteration_bounds = array<i64: 1>, scalar_prefetch = 0 : i64, scratch_operands = 0 : i64, tpu.core_type = #tpu.core_type<tc>, window_params = [{transform_indices = @transform_0, window_bounds = array<i64: 1, 2048>}, {transform_indices = @transform_1, window_bounds = array<i64: 1, 2048>}]} {
    %c0 = arith.constant 0 : index
    %c0_0 = arith.constant 0 : index
    %0 = vector.load %arg1[%c0, %c0_0] : memref<1x2048xf32, #tpu.memory_space<vmem>>, vector<1x2048xf32>
    %c0_1 = arith.constant 0 : index
    %c0_2 = arith.constant 0 : index
    %1 = vector.load %arg2[%c0_1, %c0_2] : memref<1x2048xf32, #tpu.memory_space<vmem>>, vector<1x2048xf32>
    tpu.vector_store %arg2[%c0_1, %c0_2], %0 {strides = array<i32>} : memref<1x2048xf32, #tpu.memory_space<vmem>>, vector<1x2048xf32>,
    return
  }
  func.func @transform_0(%arg0: i32) -> (i32, i32) {
    %c0_i32 = arith.constant 0 : i32
    %c0_i32_0 = arith.constant 0 : i32
    return %arg0, %c0_i32 : i32, i32
  }
  func.func @transform_1(%arg0: i32) -> (i32, i32) {
    %c0_i32 = arith.constant 0 : i32
    %c0_i32_0 = arith.constant 0 : i32
    return %arg0, %c0_i32 : i32, i32
  }
}

</mosaic_0001>

<llo_original>
// kernel: tpu_custom_call.1
$region0: #{tpu_custom_call.1}
  #allocation0 [shape = 'u32[]', space=smem, size = 0x4, offset = 0x4, fixed_abs, tag = 'smem constant byte address 0x4 - core index']
  #allocation1 [shape = 'u32[144,128]{1,0:T(1,128)}', space=vmem, size = 0x12000, scoped, tag = 'internal scratch']
  %s0 = inlined_call_operand.hbm [shape: f32[1,2048], index: 0, kind: input, shape index: {}]
  %s1 = inlined_call_operand.hbm [shape: f32[1,2048], index: 1, kind: output, shape index: {}]
  %s2 = sld [smem:[#allocation0]]
  $region18: #{tpu_custom_call.1} parent=0
    _
  %s4 = ssub.s32 1, %s2
  %s5 = scalar_select 0, %s4, %s2
  $region1: #{tpu_custom_call.1} parent=0
    #allocation2 [shape = 'u8[8192]{0}', space=vmem, size = 0x2000, scoped, tag = 'input window, operand 0, single buffered']
    #allocation3 [shape = 's32[1]{0}', space=sflag, size = 0x4, scoped, tag = 'scoped memory for tpu_custom_call.1']
    #allocation4 [shape = 's32[1]{0}', space=sflag, size = 0x4, scoped, tag = 'scoped memory for tpu_custom_call.1']
    #allocation5 [shape = 'u8[8192]{0}', space=vmem, size = 0x2000, scoped, tag = 'output window, operand 0, single buffered']
    %6 = vsyncpa [#allocation3], 0
    %7 = vsyncpa [#allocation4], 0
    // Predicated region
    $region2: #{tpu_custom_call.1} parent=1 // pred_check
      _
    $region3: #{tpu_custom_call.1} parent=1 // pred_check_branch
      %9 = sbr.rel (0) target = $region5
    $region4: #{tpu_custom_call.1} parent=1 // pred_region
      %s11 = ssub.s32 256, 256
      %12 = vsyncadd [#allocation3], %s11
      %s14 = sshll.u32 [#allocation2], 4
      %s15 = int_to_ptr.vmem [resolvable:$true] %s14
      %17 = dma.hbm_to_vmem [thread:$0]  %s0, 256, %s15, [#allocation3]
    $region5: #{tpu_custom_call.1} parent=1 // pred_fallthru
      _
    // Predicated region
    $region6: #{tpu_custom_call.1} parent=1 // pred_check
      _
    $region7: #{tpu_custom_call.1} parent=1 // pred_check_branch
      %19 = sbr.rel (0) target = $region9
    $region8: #{tpu_custom_call.1} parent=1 // pred_region
      %20 = dma.done [#allocation3], 256
    $region9: #{tpu_custom_call.1} parent=1 // pred_fallthru
      _
    %v21 = vld [vmem:[#allocation2] sm:$0xff]
    %v22 = vld [vmem:[#allocation2 + $0x8] sm:$0xff]
    %23 = vst [vmem:[#allocation5] sm:$0xff] %v21
    %24 = vst [vmem:[#allocation5 + $0x8] sm:$0xff] %v22
    // Predicated region
    $region10: #{tpu_custom_call.1} parent=1 // pred_check
      _
    $region11: #{tpu_custom_call.1} parent=1 // pred_check_branch
      %26 = sbr.rel (0) target = $region13
    $region12: #{tpu_custom_call.1} parent=1 // pred_region
      %s28 = ssub.s32 256, 256
      %29 = vsyncadd [#allocation4], %s28
      %s31 = sshll.u32 [#allocation5], 4
      %s32 = int_to_ptr.vmem [resolvable:$true] %s31
      %34 = dma.vmem_to_hbm [thread:$0]  %s32, 256, %s1, [#allocation4]
    $region13: #{tpu_custom_call.1} parent=1 // pred_fallthru
      _
    // Predicated region
    $region14: #{tpu_custom_call.1} parent=1 // pred_check
      _
    $region15: #{tpu_custom_call.1} parent=1 // pred_check_branch
      %36 = sbr.rel (0) target = $region17
    $region16: #{tpu_custom_call.1} parent=1 // pred_region
      %37 = dma.done [#allocation4], 256
    $region17: #{tpu_custom_call.1} parent=1 // pred_fallthru
      _
    %38 = vsyncpa [#allocation3], 1
    %39 = vsyncpa [#allocation4], 1

</llo_original>
